<compile_context>
chip_gen: v7x
topology: tpu7x:2x2x1
jax: 0.10.0
libtpu: 0.0.40
codegen_flags: <defaults>
</compile_context>

<pallas_src>
import jax
import jax.numpy as jnp
from jax.experimental import pallas as pl
from jax.experimental.pallas import tpu as pltpu


def _round_up(x, m):
    return ((x + m - 1) // m) * m


def _make_gcn_kernel(has_bias):
    def kernel(adj_ref, x_ref, w_ref, *rest):
        if has_bias:
            b_ref, o_ref, acc_ref = rest
        else:
            o_ref, acc_ref = rest

        k = pl.program_id(2)

        @pl.when(k == 0)
        def _():
            acc_ref[...] = jnp.zeros_like(acc_ref)

        # support tile = X[k_blk, :] @ W[:, j_blk]  (MXU, f32 accumulate)
        support = jnp.dot(x_ref[...], w_ref[...],
                          preferred_element_type=jnp.float32)
        # accumulate adj[i_blk, k_blk] @ support into the f32 scratch
        acc_ref[...] += jnp.dot(adj_ref[...], support.astype(adj_ref.dtype),
                                preferred_element_type=jnp.float32)

        @pl.when(k == pl.num_programs(2) - 1)
        def _():
            res = acc_ref[...]
            if has_bias:
                res = res + b_ref[...]      # f32 epilogue
            o_ref[...] = res.astype(o_ref.dtype)

    return kernel


def gcn_forward(x, adj, weight, bias=None, *,
                tm=256, tn=256, tk=256,
                compute_dtype=jnp.bfloat16,
                vmem_limit_bytes=32 * 1024 * 1024):
    """Computes adj @ (x @ weight) (+ bias) with one fused Pallas kernel."""
    N, K = x.shape
    Kw, F = weight.shape
    assert K == Kw
    assert adj.shape == (N, N)

    # Effective tiles: full 256-class tiles for large graphs; for small problems
    # shrink but stay (8, 128)-aligned so tiny shapes don't pay huge padding.
    tm_e = tm if N >= tm else _round_up(N, 8)       # output / adj row tile
    tk_e = tk if N >= tk else _round_up(N, 128)     # node (contraction) tile
    tn_e = tn if F >= tn else _round_up(F, 128)     # out-feature tile

    # Padded shapes: lane dims -> multiples of 128, row dims -> multiples of tile.
    n_rows_p = _round_up(N, tm_e)    # adj rows / output rows
    n_cols_p = _round_up(N, tk_e)    # adj cols / x rows (contraction over nodes)
    k_p = _round_up(K, 128)          # in_features (lane dim of x, sublane of W)
    f_p = _round_up(F, tn_e)         # out_features (lane dim of W / output)
    # TODO(synk): very large in_features would also want a K_in-tiled contraction;
    #             here the full (padded) in_features fits each X / W tile.

    f32 = jnp.float32
    x_p = jnp.zeros((n_cols_p, k_p), f32).at[:N, :K].set(x.astype(f32))
    adj_p = jnp.zeros((n_rows_p, n_cols_p), f32).at[:N, :N].set(adj.astype(f32))
    w_p = jnp.zeros((k_p, f_p), f32).at[:K, :F].set(weight.astype(f32))

    # bf16 MXU operands (f32 accumulate inside the kernel).
    adj_c = adj_p.astype(compute_dtype)
    x_c = x_p.astype(compute_dtype)
    w_c = w_p.astype(compute_dtype)

    grid = (n_rows_p // tm_e, f_p // tn_e, n_cols_p // tk_e)

    in_specs = [
        pl.BlockSpec((tm_e, tk_e), lambda i, j, k: (i, k)),   # adj tile
        pl.BlockSpec((tk_e, k_p), lambda i, j, k: (k, 0)),    # X node-block (full F_in)
        pl.BlockSpec((k_p, tn_e), lambda i, j, k: (0, j)),    # W column tile
    ]
    operands = [adj_c, x_c, w_c]

    has_bias = bias is not None
    if has_bias:
        b_p = jnp.zeros((1, f_p), f32).at[0, :F].set(bias.astype(f32))
        in_specs.append(pl.BlockSpec((1, tn_e), lambda i, j, k: (0, j)))
        operands.append(b_p)

    out_padded = pl.pallas_call(
        _make_gcn_kernel(has_bias),
        out_shape=jax.ShapeDtypeStruct((n_rows_p, f_p), f32),
        grid_spec=pltpu.PrefetchScalarGridSpec(
            num_scalar_prefetch=0,
            grid=grid,
            in_specs=in_specs,
            out_specs=pl.BlockSpec((tm_e, tn_e), lambda i, j, k: (i, j)),
            scratch_shapes=[pltpu.VMEM((tm_e, tn_e), jnp.float32)],
        ),
        compiler_params=pltpu.CompilerParams(
            dimension_semantics=("parallel", "parallel", "arbitrary"),
            vmem_limit_bytes=vmem_limit_bytes,
        ),
    )(*operands)

    return out_padded[:N, :F]


def xavier_uniform(key, shape, dtype=jnp.float32):
    fan_in, fan_out = shape
    limit = (6.0 / (fan_in + fan_out)) ** 0.5
    return jax.random.uniform(key, shape, dtype=dtype, minval=-limit, maxval=limit)


class GraphConvolutionLayerPallas:
    def __init__(self, in_features, out_features, bias=True, *, key):
        self.in_features = in_features
        self.out_features = out_features
        self._key = key
        self.weight = xavier_uniform(key, (in_features, out_features))
        self.bias = jnp.zeros((out_features,), jnp.float32) if bias else None

    def __call__(self, x, adj):
        if x.shape[1] != self.weight.shape[0]:
            # Mirror the PyTorch module: re-init weight on in_features mismatch.
            self._key, sub = jax.random.split(self._key)
            self.weight = xavier_uniform(sub, (x.shape[1], self.out_features))
        # TODO(synk): torch.spmm takes a sparse adjacency; here adj is dense.
        return gcn_forward(x, adj, self.weight, self.bias)


if __name__ == "__main__":
    num_nodes = 16
    in_features = 32
    out_features = 32

    key = jax.random.PRNGKey(0)
    k_w, k_x, k_a = jax.random.split(key, 3)

    layer = GraphConvolutionLayerPallas(in_features, out_features, bias=True, key=k_w)

    x = jax.random.normal(k_x, (num_nodes, in_features), jnp.float32)
    # Simple normalized dense adjacency (self-loops + random edges).
    adj_raw = (jax.random.uniform(k_a, (num_nodes, num_nodes)) > 0.7).astype(jnp.float32)
    adj_raw = adj_raw + jnp.eye(num_nodes, dtype=jnp.float32)
    adj = adj_raw / jnp.sum(adj_raw, axis=1, keepdims=True)

    out = layer(x, adj)
    out = jax.block_until_ready(out)
    assert out.shape == (num_nodes, out_features)

    # Reference applying the same bf16 operand rounding as the kernel (tight check).
    bf = lambda a: a.astype(jnp.bfloat16).astype(jnp.float32)
    support_ref = jnp.dot(bf(x), bf(layer.weight),
                          preferred_element_type=jnp.float32,
                          precision=jax.lax.Precision.HIGHEST)
    ref_bf16 = jnp.dot(bf(adj), bf(support_ref),
                       preferred_element_type=jnp.float32,
                       precision=jax.lax.Precision.HIGHEST) + layer.bias[None, :]
    assert jnp.allclose(out, ref_bf16, atol=2e-3, rtol=2e-3), \
        float(jnp.max(jnp.abs(out - ref_bf16)))

    # Loose sanity check against the pure-f32 reference (bf16 MXU operands in kernel).
    ref_f32 = adj @ (x @ layer.weight) + layer.bias[None, :]
    assert jnp.allclose(out, ref_f32, atol=5e-2, rtol=5e-2)

    print("KERNEL_OK")
</pallas_src>

<mosaic_0001>
module attributes {stable_mosaic.version = 11 : i64} {
  func.func @kernel(%arg0: i32, %arg1: i32, %arg2: i32, %arg3: memref<16x128xbf16, #tpu.memory_space<vmem>>, %arg4: memref<128x128xbf16, #tpu.memory_space<vmem>>, %arg5: memref<128x128xbf16, #tpu.memory_space<vmem>>, %arg6: memref<1x128xf32, #tpu.memory_space<vmem>>, %arg7: memref<16x128xf32, #tpu.memory_space<vmem>>, %arg8: memref<16x128xf32, #tpu.memory_space<vmem>>) attributes {dimension_semantics = [#tpu.dimension_semantics<parallel>, #tpu.dimension_semantics<parallel>, #tpu.dimension_semantics<arbitrary>], iteration_bounds = array<i64: 1, 1, 1>, scalar_prefetch = 0 : i64, scratch_operands = 1 : i64, tpu.core_type = #tpu.core_type<tc>, window_params = [{transform_indices = @transform_0, window_bounds = array<i64: 16, 128>}, {transform_indices = @transform_1, window_bounds = array<i64: 128, 128>}, {transform_indices = @transform_2, window_bounds = array<i64: 128, 128>}, {transform_indices = @transform_3, window_bounds = array<i64: 1, 128>}, {transform_indices = @transform_4, window_bounds = array<i64: 16, 128>}]} {
    %c0_i32 = arith.constant 0 : i32
    %0 = arith.cmpi eq, %arg2, %c0_i32 : i32
    %1 = arith.extui %0 : i1 to i32
    %c0_i32_0 = arith.constant 0 : i32
    %2 = arith.cmpi ne, %1, %c0_i32_0 : i32
    scf.if %2 {
      %cst_13 = arith.constant 0.000000e+00 : f32
      %15 = vector.broadcast %cst_13 : f32 to vector<16x128xf32>
      %c0_14 = arith.constant 0 : index
      %c0_15 = arith.constant 0 : index
      %16 = vector.load %arg8[%c0_14, %c0_15] : memref<16x128xf32, #tpu.memory_space<vmem>>, vector<16x128xf32>
      tpu.vector_store %arg8[%c0_14, %c0_15], %15 {strides = array<i32>} : memref<16x128xf32, #tpu.memory_space<vmem>>, vector<16x128xf32>,
    } else {
    }
    %c0 = arith.constant 0 : index
    %c0_1 = arith.constant 0 : index
    %3 = vector.load %arg4[%c0, %c0_1] : memref<128x128xbf16, #tpu.memory_space<vmem>>, vector<128x128xbf16>
    %c0_2 = arith.constant 0 : index
    %c0_3 = arith.constant 0 : index
    %4 = vector.load %arg5[%c0_2, %c0_3] : memref<128x128xbf16, #tpu.memory_space<vmem>>, vector<128x128xbf16>
    %cst = arith.constant dense<0.000000e+00> : vector<128x128xf32>
    %5 = tpu.matmul %3, %4, %cst {dimension_numbers = #tpu.dot_dimension_numbers<[1], [0], [0], [1], [0, 0, 1, 1], [], []>} : vector<128x128xbf16>, vector<128x128xbf16>, vector<128x128xf32> -> vector<128x128xf32>
    %c0_4 = arith.constant 0 : index
    %c0_5 = arith.constant 0 : index
    %6 = vector.load %arg8[%c0_4, %c0_5] : memref<16x128xf32, #tpu.memory_space<vmem>>, vector<16x128xf32>
    %c0_6 = arith.constant 0 : index
    %c0_7 = arith.constant 0 : index
    %7 = vector.load %arg3[%c0_6, %c0_7] : memref<16x128xbf16, #tpu.memory_space<vmem>>, vector<16x128xbf16>
    %8 = arith.truncf %5 : vector<128x128xf32> to vector<128x128xbf16>
    %cst_8 = arith.constant dense<0.000000e+00> : vector<16x128xf32>
    %9 = tpu.matmul %7, %8, %cst_8 {dimension_numbers = #tpu.dot_dimension_numbers<[1], [0], [0], [1], [0, 0, 1, 1], [], []>} : vector<16x128xbf16>, vector<128x128xbf16>, vector<16x128xf32> -> vector<16x128xf32>
    %10 = arith.addf %6, %9 : vector<16x128xf32>
    %c0_9 = arith.constant 0 : index
    %c0_10 = arith.constant 0 : index
    %11 = vector.load %arg8[%c0_9, %c0_10] : memref<16x128xf32, #tpu.memory_space<vmem>>, vector<16x128xf32>
    tpu.vector_store %arg8[%c0_9, %c0_10], %10 {strides = array<i32>} : memref<16x128xf32, #tpu.memory_space<vmem>>, vector<16x128xf32>,
    %c0_i32_11 = arith.constant 0 : i32
    %12 = arith.cmpi eq, %arg2, %c0_i32_11 : i32
    %13 = arith.extui %12 : i1 to i32
    %c0_i32_12 = arith.constant 0 : i32
    %14 = arith.cmpi ne, %13, %c0_i32_12 : i32
    scf.if %14 {
      %c0_13 = arith.constant 0 : index
      %c0_14 = arith.constant 0 : index
      %15 = vector.load %arg8[%c0_13, %c0_14] : memref<16x128xf32, #tpu.memory_space<vmem>>, vector<16x128xf32>
      %c0_15 = arith.constant 0 : index
      %c0_16 = arith.constant 0 : index
      %16 = vector.load %arg6[%c0_15, %c0_16] : memref<1x128xf32, #tpu.memory_space<vmem>>, vector<1x128xf32>
      %17 = vector.broadcast %16 : vector<1x128xf32> to vector<16x128xf32>
      %18 = arith.addf %15, %17 : vector<16x128xf32>
      %c0_17 = arith.constant 0 : index
      %c0_18 = arith.constant 0 : index
      %19 = vector.load %arg7[%c0_17, %c0_18] : memref<16x128xf32, #tpu.memory_space<vmem>>, vector<16x128xf32>
      tpu.vector_store %arg7[%c0_17, %c0_18], %18 {strides = array<i32>} : memref<16x128xf32, #tpu.memory_space<vmem>>, vector<16x128xf32>,
    } else {
    }
    return
  }
  func.func @transform_0(%arg0: i32, %arg1: i32, %arg2: i32) -> (i32, i32) {
    %c0_i32 = arith.constant 0 : i32
    return %arg0, %arg2 : i32, i32
  }
  func.func @transform_1(%arg0: i32, %arg1: i32, %arg2: i32) -> (i32, i32) {
    %c0_i32 = arith.constant 0 : i32
    %c0_i32_0 = arith.constant 0 : i32
    return %arg2, %c0_i32 : i32, i32
  }
  func.func @transform_2(%arg0: i32, %arg1: i32, %arg2: i32) -> (i32, i32) {
    %c0_i32 = arith.constant 0 : i32
    %c0_i32_0 = arith.constant 0 : i32
    return %c0_i32, %arg1 : i32, i32
  }
  func.func @transform_3(%arg0: i32, %arg1: i32, %arg2: i32) -> (i32, i32) {
    %c0_i32 = arith.constant 0 : i32
    %c0_i32_0 = arith.constant 0 : i32
    return %c0_i32, %arg1 : i32, i32
  }
  func.func @transform_4(%arg0: i32, %arg1: i32, %arg2: i32) -> (i32, i32) {
    %c0_i32 = arith.constant 0 : i32
    return %arg0, %arg1 : i32, i32
  }
}

</mosaic_0001>

<llo_original>
// kernel: tpu_custom_call.1
$region0: #{tpu_custom_call.1}
  #allocation0 [shape = 'u32[]', space=smem, size = 0x4, offset = 0x4, fixed_abs, tag = 'smem constant byte address 0x4 - core index']
  #allocation1 [shape = 'u32[144,128]{1,0:T(1,128)}', space=vmem, size = 0x12000, scoped, tag = 'internal scratch']
  #allocation2 [shape = 'f32[16,128]{1,0:T(8,128)}', space=vmem, size = 0x2000, scoped, tag = 'scratch operand']
  %s0 = inlined_call_operand.hbm [shape: bf16[16,128], index: 0, kind: input, shape index: {}]
  %s1 = inlined_call_operand.hbm [shape: bf16[128,128], index: 1, kind: input, shape index: {}]
  %s2 = inlined_call_operand.hbm [shape: bf16[128,128], index: 2, kind: input, shape index: {}]
  %s3 = inlined_call_operand.vmem [shape: f32[1,128], index: 3, kind: input, shape index: {}]
  %s4 = inlined_call_operand.hbm [shape: f32[16,128], index: 4, kind: output, shape index: {}]
  %s5 = sld [smem:[#allocation0]]
  $region46: #{tpu_custom_call.1} parent=0
    _
  %s7 = ssub.s32 1, %s5
  %s8 = scalar_select 0, %s7, %s5
  $region1: #{tpu_custom_call.1} parent=0
    #allocation3 [shape = 'u8[4096]{0}', space=vmem, size = 0x1000, scoped, tag = 'input window, operand 0, single buffered']
    #allocation4 [shape = 's32[1]{0}', space=sflag, size = 0x4, scoped, tag = 'scoped memory for tpu_custom_call.1']
    #allocation5 [shape = 's32[1]{0}', space=sflag, size = 0x4, scoped, tag = 'scoped memory for tpu_custom_call.1']
    #allocation6 [shape = 'u8[32768]{0}', space=vmem, size = 0x8000, scoped, tag = 'input window, operand 1, single buffered']
    #allocation7 [shape = 's32[1]{0}', space=sflag, size = 0x4, scoped, tag = 'scoped memory for tpu_custom_call.1']
    #allocation8 [shape = 'u8[32768]{0}', space=vmem, size = 0x8000, scoped, tag = 'input window, operand 2, single buffered']
    #allocation9 [shape = 'u8[8192]{0}', space=vmem, size = 0x2000, scoped, tag = 'output window, operand 0, single buffered']
    %9 = vsyncpa [#allocation4], 0
    %10 = vsyncpa [#allocation7], 0
    %11 = vsyncpa [#allocation5], 0
    // Predicated region
    $region2: #{tpu_custom_call.1} parent=1 // pred_check
      _
    $region3: #{tpu_custom_call.1} parent=1 // pred_check_branch
      %13 = sbr.rel (0) target = $region5
    $region4: #{tpu_custom_call.1} parent=1 // pred_region
      %s15 = ssub.s32 128, 128
      %16 = vsyncadd [#allocation4], %s15
      %s17 = sshll.u32 [#allocation3], 4
      %s18 = int_to_ptr.vmem [resolvable:$true] %s17
      %23 = dma.hbm_to_vmem [thread:$0]  %s0, 128, %s18, [#allocation4], 64, 64, 4
    $region5: #{tpu_custom_call.1} parent=1 // pred_fallthru
      _
    // Predicated region
    $region6: #{tpu_custom_call.1} parent=1 // pred_check
      _
    $region7: #{tpu_custom_call.1} parent=1 // pred_check_branch
      %25 = sbr.rel (0) target = $region9
    $region8: #{tpu_custom_call.1} parent=1 // pred_region
      %s27 = ssub.s32 1024, 1024
      %28 = vsyncadd [#allocation7], %s27
      %s29 = sshll.u32 [#allocation6], 4
      %s30 = int_to_ptr.vmem [resolvable:$true] %s29
      %35 = dma.hbm_to_vmem [thread:$0]  %s1, 1024, %s30, [#allocation7], 64, 64, 4
    $region9: #{tpu_custom_call.1} parent=1 // pred_fallthru
      _
    // Predicated region
    $region10: #{tpu_custom_call.1} parent=1 // pred_check
      _
    $region11: #{tpu_custom_call.1} parent=1 // pred_check_branch
      %37 = sbr.rel (0) target = $region13
    $region12: #{tpu_custom_call.1} parent=1 // pred_region
      %s39 = ssub.s32 1024, 1024
      %40 = vsyncadd [#allocation7], %s39
      %s41 = sshll.u32 [#allocation8], 4
      %s42 = int_to_ptr.vmem [resolvable:$true] %s41
      %47 = dma.hbm_to_vmem [thread:$0]  %s2, 1024, %s42, [#allocation7], 64, 64, 4
    $region13: #{tpu_custom_call.1} parent=1 // pred_fallthru
      _
    // Predicated region
    $region14: #{tpu_custom_call.1} parent=1 // pred_check
      _
    $region15: #{tpu_custom_call.1} parent=1 // pred_check_branch
      %49 = sbr.rel (0) target = $region17
    $region16: #{tpu_custom_call.1} parent=1 // pred_region
      _
    $region17: #{tpu_custom_call.1} parent=1 // pred_fallthru
      _
    // Predicated region
    $region18: #{tpu_custom_call.1} parent=1 // pred_check
      _
    $region19: #{tpu_custom_call.1} parent=1 // pred_check_branch
      %51 = sbr.rel (0) target = $region21
    $region20: #{tpu_custom_call.1} parent=1 // pred_region
      %52 = dma.done [#allocation4], 128
    $region21: #{tpu_custom_call.1} parent=1 // pred_fallthru
      _
    // Predicated region
    $region22: #{tpu_custom_call.1} parent=1 // pred_check
      _
    $region23: #{tpu_custom_call.1} parent=1 // pred_check_branch
      %54 = sbr.rel (0) target = $region25
    $region24: #{tpu_custom_call.1} parent=1 // pred_region
      %55 = dma.done [#allocation7], 1024
    $region25: #{tpu_custom_call.1} parent=1 // pred_fallthru
      _
    // Predicated region
    $region26: #{tpu_custom_call.1} parent=1 // pred_check
      _
    $region27: #{tpu_custom_call.1} parent=1 // pred_check_branch
      %57 = sbr.rel (0) target = $region29
    $region28: #{tpu_custom_call.1} parent=1 // pred_region
      %58 = dma.done [#allocation7], 1024
    $region29: #{tpu_custom_call.1} parent=1 // pred_fallthru
      _
    %p60 = scmp.eq.s32.totalorder 0, 0
    // Predicated region
    $region30: #{tpu_custom_call.1} parent=1 // pred_check
      %p61 = pneg %p60
    $region31: #{tpu_custom_call.1} parent=1 // pred_check_branch
      %63 = sbr.rel (%p61) target = $region33
    $region32: #{tpu_custom_call.1} parent=1 // pred_region
      %64 = vst [vmem:[#allocation2] sm:$0xff] 0.0
      %65 = vst [vmem:[#allocation2 + $0x8] sm:$0xff] 0.0
    $region33: #{tpu_custom_call.1} parent=1 // pred_fallthru
      _
    %v66 = vld [vmem:[#allocation6] sm:$0xf]
    %v67 = vld [vmem:[#allocation6 + $0x4] sm:$0xf]
    %v68 = vld [vmem:[#allocation6 + $0x8] sm:$0xf]
    %v69 = vld [vmem:[#allocation6 + $0xc] sm:$0xf]
    %v70 = vld [vmem:[#allocation6 + $0x10] sm:$0xf]
    %v71 = vld [vmem:[#allocation6 + $0x14] sm:$0xf]
    %v72 = vld [vmem:[#allocation6 + $0x18] sm:$0xf]
    %v73 = vld [vmem:[#allocation6 + $0x1c] sm:$0xf]
    %v74 = vld [vmem:[#allocation6 + $0x20] sm:$0xf]
    %v75 = vld [vmem:[#allocation6 + $0x24] sm:$0xf]
    %v76 = vld [vmem:[#allocation6 + $0x28] sm:$0xf]
    %v77 = vld [vmem:[#allocation6 + $0x2c] sm:$0xf]
    %v78 = vld [vmem:[#allocation6 + $0x30] sm:$0xf]
    %v79 = vld [vmem:[#allocation6 + $0x34] sm:$0xf]
    %v80 = vld [vmem:[#allocation6 + $0x38] sm:$0xf]
    %v81 = vld [vmem:[#allocation6 + $0x3c] sm:$0xf]
    %v82 = vld [vmem:[#allocation8] sm:$0xf]
    %v83 = vld [vmem:[#allocation8 + $0x4] sm:$0xf]
    %v84 = vld [vmem:[#allocation8 + $0x8] sm:$0xf]
    %v85 = vld [vmem:[#allocation8 + $0xc] sm:$0xf]
    %v86 = vld [vmem:[#allocation8 + $0x10] sm:$0xf]
    %v87 = vld [vmem:[#allocation8 + $0x14] sm:$0xf]
    %v88 = vld [vmem:[#allocation8 + $0x18] sm:$0xf]
    %v89 = vld [vmem:[#allocation8 + $0x1c] sm:$0xf]
    %v90 = vld [vmem:[#allocation8 + $0x20] sm:$0xf]
    %v91 = vld [vmem:[#allocation8 + $0x24] sm:$0xf]
    %v92 = vld [vmem:[#allocation8 + $0x28] sm:$0xf]
    %v93 = vld [vmem:[#allocation8 + $0x2c] sm:$0xf]
    %v94 = vld [vmem:[#allocation8 + $0x30] sm:$0xf]
    %v95 = vld [vmem:[#allocation8 + $0x34] sm:$0xf]
    %v96 = vld [vmem:[#allocation8 + $0x38] sm:$0xf]
    %v97 = vld [vmem:[#allocation8 + $0x3c] sm:$0xf]
    %v114 = vunpack.c.l.b16 %v66
    %v115 = vunpack.c.l.b16 %v67
    %v116 = vunpack.c.l.b16 %v68
    %v117 = vunpack.c.l.b16 %v69
    %v118 = vunpack.c.l.b16 %v70
    %v119 = vunpack.c.l.b16 %v71
    %v120 = vunpack.c.l.b16 %v72
    %v121 = vunpack.c.l.b16 %v73
    %v122 = vunpack.c.l.b16 %v74
    %v123 = vunpack.c.l.b16 %v75
    %v124 = vunpack.c.l.b16 %v76
    %v125 = vunpack.c.l.b16 %v77
    %v126 = vunpack.c.l.b16 %v78
    %v127 = vunpack.c.l.b16 %v79
    %v128 = vunpack.c.l.b16 %v80
    %v129 = vunpack.c.l.b16 %v81
    %v130 = vpack.c.b16 %v115, %v114
    %v131 = vpack.c.b16 %v117, %v116
    %v132 = vpack.c.b16 %v119, %v118
    %v133 = vpack.c.b16 %v121, %v120
    %v134 = vpack.c.b16 %v123, %v122
    %v135 = vpack.c.b16 %v125, %v124
    %v136 = vpack.c.b16 %v127, %v126
    %v137 = vpack.c.b16 %v129, %v128
    %v162 = vunpack.c.l.b16 %v82
    %v163 = vunpack.c.l.b16 %v83
    %v164 = vunpack.c.l.b16 %v84
    %v165 = vunpack.c.l.b16 %v85
    %v166 = vunpack.c.l.b16 %v86
    %v167 = vunpack.c.l.b16 %v87
    %v168 = vunpack.c.l.b16 %v88
    %v169 = vunpack.c.l.b16 %v89
    %v170 = vunpack.c.l.b16 %v90
    %v171 = vunpack.c.l.b16 %v91
    %v172 = vunpack.c.l.b16 %v92
    %v173 = vunpack.c.l.b16 %v93
    %v174 = vunpack.c.l.b16 %v94
    %v175 = vunpack.c.l.b16 %v95
    %v176 = vunpack.c.l.b16 %v96
    %v177 = vunpack.c.l.b16 %v97
    %v178 = vpack.c.b16 %v163, %v162
    %v179 = vpack.c.b16 %v165, %v164
    %v180 = vpack.c.b16 %v167, %v166
    %v181 = vpack.c.b16 %v169, %v168
    %v182 = vpack.c.b16 %v171, %v170
    %v183 = vpack.c.b16 %v173, %v172
    %v184 = vpack.c.b16 %v175, %v174
    %v185 = vpack.c.b16 %v177, %v176
    %194 = vmatprep.subr.bf16.mxu0 0
    %195 = vmatpush1.bf16.msra.mxu0 %v178
    %196 = vmatprep.subr.bf16.mxu0 0
    %197 = vmatpush1.bf16.msra.mxu0 %v179
    %198 = vmatprep.subr.bf16.mxu0 0
    %199 = vmatpush1.bf16.msra.mxu0 %v180
    %200 = vmatprep.subr.bf16.mxu0 0
    %201 = vmatpush1.bf16.msra.mxu0 %v181
    %202 = vmatprep.subr.bf16.mxu0 0
    %203 = vmatpush1.bf16.msra.mxu0 %v182
    %204 = vmatprep.subr.bf16.mxu0 0
    %205 = vmatpush1.bf16.msra.mxu0 %v183
    %206 = vmatprep.subr.bf16.mxu0 0
    %207 = vmatpush1.bf16.msra.mxu0 %v184
    %208 = vmatprep.subr.bf16.mxu0 0
    %209 = vmatpush1.bf16.msra.mxu0 %v185
    %210 = vmatprep.subr.bf16.mxu0 0
    %211 = vmatpush1.bf16.msra.mxu0 0
    %212 = vmatprep.subr.bf16.mxu0 0
    %213 = vmatpush1.bf16.msra.mxu0 0
    %214 = vmatprep.subr.bf16.mxu0 0
    %215 = vmatpush1.bf16.msra.mxu0 0
    %216 = vmatprep.subr.bf16.mxu0 0
    %217 = vmatpush1.bf16.msra.mxu0 0
    %218 = vmatprep.subr.bf16.mxu0 0
    %219 = vmatpush1.bf16.msra.mxu0 0
    %220 = vmatprep.subr.bf16.mxu0 0
    %221 = vmatpush1.bf16.msra.mxu0 0
    %222 = vmatprep.subr.bf16.mxu0 0
    %223 = vmatpush1.bf16.msra.mxu0 0
    %224 = vmatprep.subr.bf16.mxu0 0
    %225 = vmatpush1.bf16.msra.mxu0 0
    %226 = vmatprep.mubr.bf16.mxu0 0
    %227 = vmatmul.mubr.bf16.gmra.mrb[0].mxu0 %v130
    %v228 = vpop.f32.mrb[0].mxu0
    %v229 = vadd.f32 0.0, %v228
    %v230 = vpop.f32.mrb[0].mxu0
    %v231 = vpop.f32.mrb[0].mxu0
    %v232 = vadd.f32 0.0, %v231
    %v233 = vpop.f32.mrb[0].mxu0
    %234 = vmatprep.mubr.bf16.mxu0 0
    %235 = vmatmul.mubr.bf16.gmra.mrb[0].mxu0 %v131
    %v236 = vpop.f32.mrb[0].mxu0
    %v237 = vadd.f32 0.0, %v236
    %v238 = vpop.f32.mrb[0].mxu0
    %v239 = vpop.f32.mrb[0].mxu0
    %v240 = vadd.f32 0.0, %v239
    %v241 = vpop.f32.mrb[0].mxu0
    %242 = vmatprep.mubr.bf16.mxu0 0
    %243 = vmatmul.mubr.bf16.gmra.mrb[0].mxu0 %v132
    %v244 = vpop.f32.mrb[0].mxu0
    %v245 = vadd.f32 0.0, %v244
    %v246 = vpop.f32.mrb[0].mxu0
    %v247 = vpop.f32.mrb[0].mxu0
    %v248 = vadd.f32 0.0, %v247
    %v249 = vpop.f32.mrb[0].mxu0
    %250 = vmatprep.mubr.bf16.mxu0 0
    %251 = vmatmul.mubr.bf16.gmra.mrb[0].mxu0 %v133
    %v252 = vpop.f32.mrb[0].mxu0
    %v253 = vadd.f32 0.0, %v252
    %v254 = vpop.f32.mrb[0].mxu0
    %v255 = vpop.f32.mrb[0].mxu0
    %v256 = vadd.f32 0.0, %v255
    %v257 = vpop.f32.mrb[0].mxu0
    %258 = vmatprep.mubr.bf16.mxu0 0
    %259 = vmatmul.mubr.bf16.gmra.mrb[0].mxu0 %v134
    %v260 = vpop.f32.mrb[0].mxu0
    %v261 = vadd.f32 0.0, %v260
    %v262 = vpop.f32.mrb[0].mxu0
    %v263 = vpop.f32.mrb[0].mxu0
    %v264 = vadd.f32 0.0, %v263
    %v265 = vpop.f32.mrb[0].mxu0
    %266 = vmatprep.mubr.bf16.mxu0 0
    %267 = vmatmul.mubr.bf16.gmra.mrb[0].mxu0 %v135
    %v268 = vpop.f32.mrb[0].mxu0
    %v269 = vadd.f32 0.0, %v268
    %v270 = vpop.f32.mrb[0].mxu0
    %v271 = vpop.f32.mrb[0].mxu0
    %v272 = vadd.f32 0.0, %v271
    %v273 = vpop.f32.mrb[0].mxu0
    %274 = vmatprep.mubr.bf16.mxu0 0
    %275 = vmatmul.mubr.bf16.gmra.mrb[0].mxu0 %v136
    %v276 = vpop.f32.mrb[0].mxu0
    %v277 = vadd.f32 0.0, %v276
    %v278 = vpop.f32.mrb[0].mxu0
    %v279 = vpop.f32.mrb[0].mxu0
    %v280 = vadd.f32 0.0, %v279
    %v281 = vpop.f32.mrb[0].mxu0
    %282 = vmatprep.mubr.bf16.mxu0 0
    %283 = vmatmul.mubr.bf16.gmra.mrb[0].mxu0 %v137
    %v284 = vpop.f32.mrb[0].mxu0
    %v285 = vadd.f32 0.0, %v284
    %v286 = vpop.f32.mrb[0].mxu0
    %v287 = vpop.f32.mrb[0].mxu0
    %v288 = vadd.f32 0.0, %v287
    %v289 = vpop.f32.mrb[0].mxu0
    %290 = vdwg.mxu0
    %v291 = vld [vmem:[#allocation2] sm:$0xff]
    %v292 = vld [vmem:[#allocation2 + $0x8] sm:$0xff]
    %v293 = vld [vmem:[#allocation3] sm:$0xf]
    %v294 = vld [vmem:[#allocation3 + $0x4] sm:$0xf]
    %v295 = vpack.c.bf16 %v232, %v229
    %v296 = vpack.c.bf16 %v240, %v237
    %v297 = vpack.c.bf16 %v248, %v245
    %v298 = vpack.c.bf16 %v256, %v253
    %v299 = vpack.c.bf16 %v264, %v261
    %v300 = vpack.c.bf16 %v272, %v269
    %v301 = vpack.c.bf16 %v280, %v277
    %v302 = vpack.c.bf16 %v288, %v285
    %v305 = vunpack.c.l.b16 %v293
    %v306 = vunpack.c.l.b16 %v294
    %v307 = vpack.c.b16 %v306, %v305
    %309 = vmatprep.subr.bf16.mxu0 0
    %310 = vmatpush1.bf16.msra.mxu0 %v295
    %311 = vmatprep.subr.bf16.mxu0 0
    %312 = vmatpush1.bf16.msra.mxu0 %v296
    %313 = vmatprep.subr.bf16.mxu0 0
    %314 = vmatpush1.bf16.msra.mxu0 %v297
    %315 = vmatprep.subr.bf16.mxu0 0
    %316 = vmatpush1.bf16.msra.mxu0 %v298
    %317 = vmatprep.subr.bf16.mxu0 0
    %318 = vmatpush1.bf16.msra.mxu0 %v299
    %319 = vmatprep.subr.bf16.mxu0 0
    %320 = vmatpush1.bf16.msra.mxu0 %v300
    %321 = vmatprep.subr.bf16.mxu0 0
    %322 = vmatpush1.bf16.msra.mxu0 %v301
    %323 = vmatprep.subr.bf16.mxu0 0
    %324 = vmatpush1.bf16.msra.mxu0 %v302
    %325 = vmatprep.subr.bf16.mxu0 0
    %326 = vmatpush1.bf16.msra.mxu0 0
    %327 = vmatprep.subr.bf16.mxu0 0
    %328 = vmatpush1.bf16.msra.mxu0 0
    %329 = vmatprep.subr.bf16.mxu0 0
    %330 = vmatpush1.bf16.msra.mxu0 0
    %331 = vmatprep.subr.bf16.mxu0 0
    %332 = vmatpush1.bf16.msra.mxu0 0
    %333 = vmatprep.subr.bf16.mxu0 0
    %334 = vmatpush1.bf16.msra.mxu0 0
    %335 = vmatprep.subr.bf16.mxu0 0
    %336 = vmatpush1.bf16.msra.mxu0 0
    %337 = vmatprep.subr.bf16.mxu0 0
    %338 = vmatpush1.bf16.msra.mxu0 0
    %339 = vmatprep.subr.bf16.mxu0 0
    %340 = vmatpush1.bf16.msra.mxu0 0
    %341 = vmatprep.mubr.bf16.mxu0 0
    %342 = vmatmul.mubr.bf16.gmra.mrb[0].mxu0 %v307
    %v343 = vpop.f32.mrb[0].mxu0
    %v344 = vadd.f32 0.0, %v343
    %v345 = vpop.f32.mrb[0].mxu0
    %v346 = vpop.f32.mrb[0].mxu0
    %v347 = vadd.f32 0.0, %v346
    %v348 = vpop.f32.mrb[0].mxu0
    %349 = vdwg.mxu0
    %v350 = vadd.f32 %v291, %v344
    %v351 = vadd.f32 %v292, %v347
    %352 = vst [vmem:[#allocation2] sm:$0xff] %v350
    %353 = vst [vmem:[#allocation2 + $0x8] sm:$0xff] %v351
    // Predicated region
    $region34: #{tpu_custom_call.1} parent=1 // pred_check
      %p354 = pneg %p60
    $region35: #{tpu_custom_call.1} parent=1 // pred_check_branch
      %356 = sbr.rel (%p354) target = $region37
    $region36: #{tpu_custom_call.1} parent=1 // pred_region
      %v357 = vld [vmem:[#allocation2] sm:$0xff]
      %v358 = vld [vmem:[#allocation2 + $0x8] sm:$0xff]
      %v359 = vld [vmem:[%s3] sm:$0x1]
      %v361 = vlaneseq
      %v362 = vshrl.u32 %v361, 7
      %v363 = vsub.s32 0, %v362
      %v364 = vrot.slane %v359, %v363
      %v366 = vadd.f32 %v357, %v364
      %v367 = vadd.f32 %v358, %v364
      %368 = vst [vmem:[#allocation9] sm:$0xff] %v366
      %369 = vst [vmem:[#allocation9 + $0x8] sm:$0xff] %v367
    $region37: #{tpu_custom_call.1} parent=1 // pred_fallthru
      _
    // Predicated region
    $region38: #{tpu_custom_call.1} parent=1 // pred_check
      _
    $region39: #{tpu_custom_call.1} parent=1 // pred_check_branch
      %371 = sbr.rel (0) target = $region41
    $region40: #{tpu_custom_call.1} parent=1 // pred_region
      %s373 = ssub.s32 256, 256
      %374 = vsyncadd [#allocation5], %s373
      %s375 = sshll.u32 [#allocation9], 4
      %s376 = int_to_ptr.vmem [resolvable:$true] %s375
      %381 = dma.vmem_to_hbm [thread:$0]  %s376, 256, %s4, [#allocation5], 128, 128, 8
    $region41: #{tpu_custom_call.1} parent=1 // pred_fallthru
      _
    // Predicated region
    $region42: #{tpu_custom_call.1} parent=1 // pred_check
      _
    $region43: #{tpu_custom_call.1} parent=1 // pred_check_branch
      %383 = sbr.rel (0) target = $region45
    $region44: #{tpu_custom_call.1} parent=1 // pred_region
      %384 = dma.done [#allocation5], 256
    $region45: #{tpu_custom_call.1} parent=1 // pred_fallthru
      _
    %385 = vsyncpa [#allocation4], 1
    %386 = vsyncpa [#allocation7], 1
    %387 = vsyncpa [#allocation5], 1

</llo_original>
